<compile_context>
chip_gen: v6e
topology: v6e:2x2x1
jax: 0.10.0
libtpu: 0.0.40
codegen_flags: <defaults>
</compile_context>

<pallas_src>
import functools
import math

import jax
import jax.numpy as jnp
from jax.experimental import pallas as pl
from jax.experimental.pallas import tpu as pltpu

# ---------------------------------------------------------------------------
# Static architecture description (ResNet-50, last_stride=2)
# ---------------------------------------------------------------------------
LAYERS = (3, 4, 6, 3)
LAST_STRIDE = 2
PLAN = ((64, LAYERS[0], 1), (128, LAYERS[1], 2),
        (256, LAYERS[2], 2), (512, LAYERS[3], LAST_STRIDE))

TM_BASE = 256          # bf16 tiles at 256 stay far under VMEM limits on v5e/v6e/v7x
NEG = -1e30            # -inf substitute for max-pool padding (bf16 representable)


def _ceil_to(x, m):
    return ((x + m - 1) // m) * m


def _pick_m(m):
    """Adaptive M tile: multiple of 16, <= TM_BASE, minimal padding."""
    nt = -(-m // TM_BASE)
    tm = _ceil_to(-(-m // nt), 16)
    return tm, nt * tm


def _pick_k(k):
    """(TK, padded K).  K <= 512 is padded to a 128 multiple and used whole."""
    if k <= 512:
        kp = _ceil_to(k, 128)
        return kp, kp
    for cand in (512, 384, 256, 128):
        if k % cand == 0:
            return cand, k
    return 512, _ceil_to(k, 512)


def _pick_n(n):
    np_ = _ceil_to(n, 128)
    tn = 256 if np_ % 256 == 0 else 128
    return tn, np_


# ---------------------------------------------------------------------------
# Pallas kernels
# ---------------------------------------------------------------------------
def _matmul_bn_kernel(a_ref, b_ref, scale_ref, bias_ref, *rest, relu, has_res):
    """Tiled bf16 matmul, f32 accumulation, fused BN affine (+residual)(+ReLU)."""
    if has_res:
        res_ref, o_ref, acc_ref = rest
    else:
        o_ref, acc_ref = rest
    k = pl.program_id(2)
    prod = jnp.dot(a_ref[...], b_ref[...], preferred_element_type=jnp.float32)

    @pl.when(k == 0)
    def _():
        acc_ref[...] = prod

    @pl.when(k > 0)
    def _():
        acc_ref[...] += prod

    @pl.when(k == pl.num_programs(2) - 1)
    def _():
        out = acc_ref[...] * scale_ref[...] + bias_ref[...]
        if has_res:
            out = out + res_ref[...].astype(jnp.float32)
        if relu:
            out = jnp.maximum(out, 0.0)
        o_ref[...] = out.astype(o_ref.dtype)


_MM_KERNELS = {(r, h): functools.partial(_matmul_bn_kernel, relu=r, has_res=h)
               for r in (False, True) for h in (False, True)}


def _conv3x3_kernel(x_ref, w_ref, scale_ref, bias_ref, o_ref, *, wp, tm):
    """Fused 3x3 stride-1 conv: in-kernel patch gather from a flat padded slab.

    x_ref   : (slab_rows, Cin)  flattened, zero-padded image (VMEM resident)
    w_ref   : (9, Cin, TN)      per-tap weights
    output tile rows are positions on the *padded* H x W grid (border rows are
    garbage and sliced off outside).
    """
    i = pl.program_id(1)
    halo = 2 * wp + 2
    base = pl.multiple_of(i * tm, 16)                 # tile-aligned dynamic offset
    a_big = x_ref[pl.ds(base, tm + halo), :]          # rows needed by all 9 taps
    acc = None
    for dy in range(3):
        for dx in range(3):
            off = dy * wp + dx                        # static shift per tap
            a = a_big[off:off + tm, :]
            prod = jnp.dot(a, w_ref[dy * 3 + dx],
                           preferred_element_type=jnp.float32)
            acc = prod if acc is None else acc + prod
    out = acc * scale_ref[...] + bias_ref[...]
    o_ref[...] = jnp.maximum(out, 0.0).astype(o_ref.dtype)


def _maxpool_kernel(p00, p01, p10, p11, o_ref, *, ho, wo):
    """3x3/s2 max-pool from 4 stride-phase slabs (per-image block)."""
    phases = ((p00, p01), (p10, p11))
    acc = None
    for dy in range(3):
        for dx in range(3):
            r = phases[dy % 2][dx % 2]
            v = r[dy // 2:dy // 2 + ho, dx // 2:dx // 2 + wo, :]
            acc = v if acc is None else jnp.maximum(acc, v)
    o_ref[...] = acc


def _gmax_kernel(x_ref, o_ref):
    # global spatial max: (H*W, C) -> (1, C), f32 output
    o_ref[...] = jnp.max(x_ref[...].astype(jnp.float32), axis=0, keepdims=True)


# ---------------------------------------------------------------------------
# Pallas wrappers
# ---------------------------------------------------------------------------
@functools.partial(jax.jit, static_argnames=("relu",))
def matmul_bn(a, w, scale, bias, residual=None, *, relu=True):
    """relu?((a @ w) * scale + bias (+ residual)). a/w/res bf16, acc f32."""
    m, k = a.shape
    kp, np_ = w.shape
    tm, mp = _pick_m(m)
    tk, _ = _pick_k(kp)
    tn = 256 if np_ % 256 == 0 else 128
    a_p = a if (mp == m and kp == k) else jnp.pad(a, ((0, mp - m), (0, kp - k)))

    has_res = residual is not None
    inputs = [a_p, w, scale, bias]
    in_specs = [
        pl.BlockSpec((tm, tk), lambda i, j, kk: (i, kk)),
        pl.BlockSpec((tk, tn), lambda i, j, kk: (kk, j)),
        pl.BlockSpec((1, tn), lambda i, j, kk: (0, j)),
        pl.BlockSpec((1, tn), lambda i, j, kk: (0, j)),
    ]
    if has_res:
        rm, rn = residual.shape
        res_p = residual.astype(jnp.bfloat16)
        if rm != mp or rn != np_:
            res_p = jnp.pad(res_p, ((0, mp - rm), (0, np_ - rn)))
        inputs.append(res_p)
        in_specs.append(pl.BlockSpec((tm, tn), lambda i, j, kk: (i, j)))

    return pl.pallas_call(
        _MM_KERNELS[(relu, has_res)],
        out_shape=jax.ShapeDtypeStruct((mp, np_), jnp.bfloat16),
        grid_spec=pltpu.PrefetchScalarGridSpec(
            num_scalar_prefetch=0,
            grid=(mp // tm, np_ // tn, kp // tk),
            in_specs=in_specs,
            out_specs=pl.BlockSpec((tm, tn), lambda i, j, kk: (i, j)),
            scratch_shapes=[pltpu.VMEM((tm, tn), jnp.float32)],
        ),
        compiler_params=pltpu.CompilerParams(
            dimension_semantics=("parallel", "parallel", "arbitrary")),
    )(*inputs)


@functools.partial(jax.jit, static_argnames=("cout", "stride", "relu"))
def conv1x1_bn(x, p, residual=None, *, cout, stride=1, relu=True):
    if stride > 1:
        x = x[:, ::stride, ::stride, :]
    n, h, w, _ = x.shape
    a = x.reshape(n * h * w, -1)
    res = None if residual is None else residual.reshape(n * h * w, -1)
    out = matmul_bn(a, p["w"], p["scale"], p["bias"], res, relu=relu)
    return out[:n * h * w, :cout].reshape(n, h, w, cout)


@functools.partial(jax.jit, static_argnames=("cout", "kh", "kw", "stride", "pad", "relu"))
def conv_im2col_bn(x, p, *, cout, kh, kw, stride, pad, relu):
    """im2col path -- used only for the 7x7 stem and the 3 stride-2 3x3 convs."""
    n, h, w, c = x.shape
    xp = jnp.pad(x, ((0, 0), (pad, pad), (pad, pad), (0, 0)))
    hp, wp = h + 2 * pad, w + 2 * pad
    ho = (hp - kh) // stride + 1
    wo = (wp - kw) // stride + 1
    cols = []
    for i in range(kh):
        for j in range(kw):
            cols.append(xp[:, i:i + stride * (ho - 1) + 1:stride,
                           j:j + stride * (wo - 1) + 1:stride, :])
    a = jnp.concatenate(cols, axis=-1).reshape(n * ho * wo, kh * kw * c)
    out = matmul_bn(a, p["w"], p["scale"], p["bias"], relu=relu)
    return out[:n * ho * wo, :cout].reshape(n, ho, wo, cout)


@functools.partial(jax.jit, static_argnames=("cout",))
def conv3x3_bn_fused(x, p, *, cout):
    """3x3 / stride 1 / pad 1 conv + BN + ReLU, patch gather fused in-kernel."""
    n, h, w, cin = x.shape
    hp, wp = h + 2, w + 2
    m_img = hp * wp
    tm, mp = _pick_m(m_img)
    np_ = p["w"].shape[2]
    tn = 256 if np_ % 256 == 0 else 128
    halo = 2 * wp + 2
    slab_rows = _ceil_to(mp + halo, 8)
    # flat, zero-padded per-image slab; DMA'd to VMEM once per image
    xp = jnp.pad(x, ((0, 0), (1, 1), (1, 1), (0, 0))).reshape(n, m_img, cin)
    slab = jnp.pad(xp, ((0, 0), (wp + 1, slab_rows - m_img - (wp + 1)), (0, 0)))

    kernel = functools.partial(_conv3x3_kernel, wp=wp, tm=tm)
    out = pl.pallas_call(
        kernel,
        out_shape=jax.ShapeDtypeStruct((n, mp, np_), jnp.bfloat16),
        grid_spec=pltpu.PrefetchScalarGridSpec(
            num_scalar_prefetch=0,
            grid=(n, mp // tm, np_ // tn),
            in_specs=[
                pl.BlockSpec((None, slab_rows, cin), lambda b, i, j: (b, 0, 0)),
                pl.BlockSpec((9, cin, tn), lambda b, i, j: (0, 0, j)),
                pl.BlockSpec((1, tn), lambda b, i, j: (0, j)),
                pl.BlockSpec((1, tn), lambda b, i, j: (0, j)),
            ],
            out_specs=pl.BlockSpec((None, tm, tn), lambda b, i, j: (b, i, j)),
        ),
        compiler_params=pltpu.CompilerParams(
            dimension_semantics=("parallel", "parallel", "parallel")),
    )(slab, p["w"], p["scale"], p["bias"])
    # outputs live on the padded H x W grid -> crop the valid interior
    out = out[:, :m_img, :cout].reshape(n, hp, wp, cout)
    return out[:, 1:1 + h, 1:1 + w, :]


@jax.jit
def max_pool_3x3_s2(x):
    """MaxPool2d(kernel_size=3, stride=2, padding=1) via 4 stride phases."""
    n, h, w, c = x.shape
    xp = jnp.pad(x, ((0, 0), (1, 1), (1, 1), (0, 0)), constant_values=NEG)
    hp, wp = h + 2, w + 2
    ho = (hp - 3) // 2 + 1
    wo = (wp - 3) // 2 + 1
    phases = []
    for ry in (0, 1):
        for rx in (0, 1):
            ph = xp[:, ry::2, rx::2, :]
            phases.append(jnp.pad(
                ph,
                ((0, 0), (0, ho + 1 - ph.shape[1]), (0, wo + 1 - ph.shape[2]), (0, 0)),
                constant_values=NEG))
    kernel = functools.partial(_maxpool_kernel, ho=ho, wo=wo)
    return pl.pallas_call(
        kernel,
        out_shape=jax.ShapeDtypeStruct((n, ho, wo, c), x.dtype),
        grid_spec=pltpu.PrefetchScalarGridSpec(
            num_scalar_prefetch=0,
            grid=(n,),
            in_specs=[pl.BlockSpec((None, ho + 1, wo + 1, c),
                                   lambda b: (b, 0, 0, 0))] * 4,
            out_specs=pl.BlockSpec((None, ho, wo, c), lambda b: (b, 0, 0, 0)),
        ),
        compiler_params=pltpu.CompilerParams(dimension_semantics=("parallel",)),
    )(*phases)


@jax.jit
def global_max_pool(x):
    """adaptive_max_pool2d(output_size=1) + flatten -> (N, C) float32."""
    n, h, w, c = x.shape
    xf = x.reshape(n, h * w, c)
    out = pl.pallas_call(
        _gmax_kernel,
        out_shape=jax.ShapeDtypeStruct((n, 1, c), jnp.float32),
        grid_spec=pltpu.PrefetchScalarGridSpec(
            num_scalar_prefetch=0,
            grid=(n,),
            in_specs=[pl.BlockSpec((None, h * w, c), lambda b: (b, 0, 0))],
            out_specs=pl.BlockSpec((None, 1, c), lambda b: (b, 0, 0)),
        ),
        compiler_params=pltpu.CompilerParams(dimension_semantics=("parallel",)),
    )(xf)
    return out.reshape(n, c)


# ---------------------------------------------------------------------------
# Deterministic parameters + one-time packing (weights bf16, BN folded/padded)
# ---------------------------------------------------------------------------
class _KeyGen:
    def __init__(self, key):
        self._key = key
        self._i = 0

    def __call__(self):
        self._i += 1
        return jax.random.fold_in(self._key, self._i)


def _conv_weight(key, cout, cin, kh, kw):
    n = kh * kw * cout
    return jax.random.normal(key, (cout, cin, kh, kw), jnp.float32) * math.sqrt(2.0 / n)


def _bn_affine(key, c, eps=1e-5):
    k1, k2, k3, k4 = jax.random.split(key, 4)
    gamma = jax.random.uniform(k1, (c,), jnp.float32, 0.5, 1.5)
    beta = 0.1 * jax.random.normal(k2, (c,), jnp.float32)
    mean = 0.1 * jax.random.normal(k3, (c,), jnp.float32)
    var = jax.random.uniform(k4, (c,), jnp.float32, 0.5, 1.5)
    scale = gamma / jnp.sqrt(var + eps)
    bias = beta - mean * scale
    return scale, bias


def _pack_conv(w, scale, bias, *, fused3x3):
    """Pre-pack a conv+BN once: transpose, pad to tiles, cast to bf16."""
    cout, cin, kh, kw = w.shape
    _, np_ = _pick_n(cout)
    s = jnp.pad(scale.reshape(1, -1), ((0, 0), (0, np_ - cout)))
    b = jnp.pad(bias.reshape(1, -1), ((0, 0), (0, np_ - cout)))
    wt = jnp.transpose(w, (2, 3, 1, 0))                      # (kh, kw, cin, cout)
    if fused3x3:
        wt = wt.reshape(kh * kw, cin, cout)                  # tap-major
        wt = jnp.pad(wt, ((0, 0), (0, 0), (0, np_ - cout)))
    else:
        k = kh * kw * cin
        _, kp = _pick_k(k)
        wt = wt.reshape(k, cout)
        wt = jnp.pad(wt, ((0, kp - k), (0, np_ - cout)))
    return {"w": wt.astype(jnp.bfloat16), "scale": s, "bias": b}


def make_resnet_params(key):
    kg = _KeyGen(key)
    params = {
        "stem": _pack_conv(_conv_weight(kg(), 64, 3, 7, 7),
                           *_bn_affine(kg(), 64), fused3x3=False),
        "layers": [],
    }
    inplanes = 64
    for planes, blocks, stride in PLAN:
        layer = []
        for bi in range(blocks):
            s = stride if bi == 0 else 1
            block = {
                "conv1": _pack_conv(_conv_weight(kg(), planes, inplanes, 1, 1),
                                    *_bn_affine(kg(), planes), fused3x3=False),
                "conv2": _pack_conv(_conv_weight(kg(), planes, planes, 3, 3),
                                    *_bn_affine(kg(), planes), fused3x3=(s == 1)),
                "conv3": _pack_conv(_conv_weight(kg(), planes * 4, planes, 1, 1),
                                    *_bn_affine(kg(), planes * 4), fused3x3=False),
            }
            if bi == 0 and (s != 1 or inplanes != planes * 4):
                block["ds"] = _pack_conv(
                    _conv_weight(kg(), planes * 4, inplanes, 1, 1),
                    *_bn_affine(kg(), planes * 4), fused3x3=False)
            if bi == 0:
                inplanes = planes * 4
            layer.append(block)
        params["layers"].append(layer)
    return params


# ---------------------------------------------------------------------------
# Forward pass (matches ResNet.forward; eval-mode BN)
# ---------------------------------------------------------------------------
def bottleneck_forward(x, p, planes, stride):
    out = conv1x1_bn(x, p["conv1"], cout=planes, relu=True)
    if stride == 1:
        out = conv3x3_bn_fused(out, p["conv2"], cout=planes)
    else:
        out = conv_im2col_bn(out, p["conv2"], cout=planes, kh=3, kw=3,
                             stride=stride, pad=1, relu=True)
    if "ds" in p:
        residual = conv1x1_bn(x, p["ds"], cout=planes * 4, stride=stride, relu=False)
    else:
        residual = x
    # conv3 + bn3 + residual add + final ReLU fused into the matmul epilogue
    return conv1x1_bn(out, p["conv3"], residual, cout=planes * 4, relu=True)


def resnet_forward(x_nchw, params):
    x = jnp.transpose(x_nchw, (0, 2, 3, 1)).astype(jnp.bfloat16)  # NCHW -> NHWC
    # stem: conv 7x7 s2 p3 + BN (reference forward has NO ReLU here) + maxpool
    x = conv_im2col_bn(x, params["stem"], cout=64, kh=7, kw=7, stride=2, pad=3,
                       relu=False)
    x = max_pool_3x3_s2(x)
    for (planes, blocks, stride), layer_p in zip(PLAN, params["layers"]):
        for bi, bp in enumerate(layer_p):
            x = bottleneck_forward(x, bp, planes, stride if bi == 0 else 1)
    # logits(): adaptive_max_pool2d(1) + flatten -> (N, 2048) float32
    return global_max_pool(x)


if __name__ == "__main__":
    root = jax.random.PRNGKey(0)
    params = make_resnet_params(jax.random.fold_in(root, 1))
    x = jax.random.normal(jax.random.fold_in(root, 2), (2, 3, 64, 64), jnp.float32)

    out = resnet_forward(x, params)
    out = jax.block_until_ready(out)

    assert out.shape == (2, 2048), out.shape
    assert bool(jnp.all(jnp.isfinite(out)))
    print("KERNEL_OK")
</pallas_src>

<mosaic_0001>
module attributes {stable_mosaic.version = 11 : i64} {
  func.func @_matmul_bn_kernel(%arg0: i32, %arg1: i32, %arg2: i32, %arg3: memref<256x256xbf16, #tpu.memory_space<vmem>>, %arg4: memref<256x128xbf16, #tpu.memory_space<vmem>>, %arg5: memref<1x128xf32, #tpu.memory_space<vmem>>, %arg6: memref<1x128xf32, #tpu.memory_space<vmem>>, %arg7: memref<256x128xbf16, #tpu.memory_space<vmem>>, %arg8: memref<256x128xf32, #tpu.memory_space<vmem>>) attributes {dimension_semantics = [#tpu.dimension_semantics<parallel>, #tpu.dimension_semantics<parallel>, #tpu.dimension_semantics<arbitrary>], iteration_bounds = array<i64: 8, 1, 1>, scalar_prefetch = 0 : i64, scratch_operands = 1 : i64, tpu.core_type = #tpu.core_type<tc>, window_params = [{transform_indices = @transform_0, window_bounds = array<i64: 256, 256>}, {transform_indices = @transform_1, window_bounds = array<i64: 256, 128>}, {transform_indices = @transform_2, window_bounds = array<i64: 1, 128>}, {transform_indices = @transform_3, window_bounds = array<i64: 1, 128>}, {transform_indices = @transform_4, window_bounds = array<i64: 256, 128>}]} {
    %c0 = arith.constant 0 : index
    %c0_0 = arith.constant 0 : index
    %0 = vector.load %arg3[%c0, %c0_0] : memref<256x256xbf16, #tpu.memory_space<vmem>>, vector<256x256xbf16>
    %c0_1 = arith.constant 0 : index
    %c0_2 = arith.constant 0 : index
    %1 = vector.load %arg4[%c0_1, %c0_2] : memref<256x128xbf16, #tpu.memory_space<vmem>>, vector<256x128xbf16>
    %cst = arith.constant dense<0.000000e+00> : vector<256x128xf32>
    %2 = tpu.matmul %0, %1, %cst {dimension_numbers = #tpu.dot_dimension_numbers<[1], [0], [0], [1], [0, 0, 1, 1], [], []>} : vector<256x256xbf16>, vector<256x128xbf16>, vector<256x128xf32> -> vector<256x128xf32>
    %c0_i32 = arith.constant 0 : i32
    %3 = arith.cmpi eq, %arg2, %c0_i32 : i32
    %4 = arith.extui %3 : i1 to i32
    %c0_i32_3 = arith.constant 0 : i32
    %5 = arith.cmpi ne, %4, %c0_i32_3 : i32
    scf.if %5 {
      %c0_8 = arith.constant 0 : index
      %c0_9 = arith.constant 0 : index
      %12 = vector.load %arg8[%c0_8, %c0_9] : memref<256x128xf32, #tpu.memory_space<vmem>>, vector<256x128xf32>
      tpu.vector_store %arg8[%c0_8, %c0_9], %2 {strides = array<i32>} : memref<256x128xf32, #tpu.memory_space<vmem>>, vector<256x128xf32>,
    } else {
    }
    %c0_i32_4 = arith.constant 0 : i32
    %6 = arith.cmpi sgt, %arg2, %c0_i32_4 : i32
    %7 = arith.extui %6 : i1 to i32
    %c0_i32_5 = arith.constant 0 : i32
    %8 = arith.cmpi ne, %7, %c0_i32_5 : i32
    scf.if %8 {
      %c0_8 = arith.constant 0 : index
      %c0_9 = arith.constant 0 : index
      %12 = vector.load %arg8[%c0_8, %c0_9] : memref<256x128xf32, #tpu.memory_space<vmem>>, vector<256x128xf32>
      %13 = arith.addf %12, %2 : vector<256x128xf32>
      %c0_10 = arith.constant 0 : index
      %c0_11 = arith.constant 0 : index
      %14 = vector.load %arg8[%c0_10, %c0_11] : memref<256x128xf32, #tpu.memory_space<vmem>>, vector<256x128xf32>
      tpu.vector_store %arg8[%c0_10, %c0_11], %13 {strides = array<i32>} : memref<256x128xf32, #tpu.memory_space<vmem>>, vector<256x128xf32>,
    } else {
    }
    %c0_i32_6 = arith.constant 0 : i32
    %9 = arith.cmpi eq, %arg2, %c0_i32_6 : i32
    %10 = arith.extui %9 : i1 to i32
    %c0_i32_7 = arith.constant 0 : i32
    %11 = arith.cmpi ne, %10, %c0_i32_7 : i32
    scf.if %11 {
      %c0_8 = arith.constant 0 : index
      %c0_9 = arith.constant 0 : index
      %12 = vector.load %arg8[%c0_8, %c0_9] : memref<256x128xf32, #tpu.memory_space<vmem>>, vector<256x128xf32>
      %c0_10 = arith.constant 0 : index
      %c0_11 = arith.constant 0 : index
      %13 = vector.load %arg5[%c0_10, %c0_11] : memref<1x128xf32, #tpu.memory_space<vmem>>, vector<1x128xf32>
      %14 = vector.broadcast %13 : vector<1x128xf32> to vector<256x128xf32>
      %15 = arith.mulf %12, %14 : vector<256x128xf32>
      %c0_12 = arith.constant 0 : index
      %c0_13 = arith.constant 0 : index
      %16 = vector.load %arg6[%c0_12, %c0_13] : memref<1x128xf32, #tpu.memory_space<vmem>>, vector<1x128xf32>
      %17 = vector.broadcast %16 : vector<1x128xf32> to vector<256x128xf32>
      %18 = arith.addf %15, %17 : vector<256x128xf32>
      %19 = arith.truncf %18 : vector<256x128xf32> to vector<256x128xbf16>
      %c0_14 = arith.constant 0 : index
      %c0_15 = arith.constant 0 : index
      %20 = vector.load %arg7[%c0_14, %c0_15] : memref<256x128xbf16, #tpu.memory_space<vmem>>, vector<256x128xbf16>
      tpu.vector_store %arg7[%c0_14, %c0_15], %19 {strides = array<i32>} : memref<256x128xbf16, #tpu.memory_space<vmem>>, vector<256x128xbf16>,
    } else {
    }
    return
  }
  func.func @transform_0(%arg0: i32, %arg1: i32, %arg2: i32) -> (i32, i32) {
    %c0_i32 = arith.constant 0 : i32
    return %arg0, %arg2 : i32, i32
  }
  func.func @transform_1(%arg0: i32, %arg1: i32, %arg2: i32) -> (i32, i32) {
    %c0_i32 = arith.constant 0 : i32
    return %arg2, %arg1 : i32, i32
  }
  func.func @transform_2(%arg0: i32, %arg1: i32, %arg2: i32) -> (i32, i32) {
    %c0_i32 = arith.constant 0 : i32
    %c0_i32_0 = arith.constant 0 : i32
    return %c0_i32, %arg1 : i32, i32
  }
  func.func @transform_3(%arg0: i32, %arg1: i32, %arg2: i32) -> (i32, i32) {
    %c0_i32 = arith.constant 0 : i32
    %c0_i32_0 = arith.constant 0 : i32
    return %c0_i32, %arg1 : i32, i32
  }
  func.func @transform_4(%arg0: i32, %arg1: i32, %arg2: i32) -> (i32, i32) {
    %c0_i32 = arith.constant 0 : i32
    return %arg0, %arg1 : i32, i32
  }
}

</mosaic_0001>

<llo_original>
// kernel: matmul_bn.1
$region0: #{matmul_bn.1}
  #allocation0 [shape = 'u32[]', space=smem, size = 0x4, offset = 0x4, fixed_abs, tag = 'smem constant byte address 0x4 - core index']
  #allocation1 [shape = 'u32[144,128]{1,0:T(1,128)}', space=vmem, size = 0x12000, scoped, tag = 'internal scratch']
  #allocation2 [shape = 'f32[256,128]{1,0:T(8,128)}', space=vmem, size = 0x20000, scoped, tag = 'scratch operand']
  %s0 = inlined_call_operand.vmem [shape: bf16[2048,256], index: 0, kind: input, shape index: {}]
  %s1 = inlined_call_operand.vmem [shape: bf16[256,128], index: 1, kind: input, shape index: {}]
  %s2 = inlined_call_operand.vmem [shape: f32[1,128], index: 2, kind: input, shape index: {}]
  %s3 = inlined_call_operand.vmem [shape: f32[1,128], index: 3, kind: input, shape index: {}]
  %s4 = inlined_call_operand.hbm [shape: bf16[2048,128], index: 4, kind: output, shape index: {}]
  %s5 = sld [smem:[#allocation0]]
  $region61: #{matmul_bn.1} parent=0
    _
  %s7 = ssub.s32 1, %s5
  %s8 = scalar_select 0, %s7, %s5
  $region1: #{matmul_bn.1} parent=0
    #allocation3 [shape = 'u8[131072]{0}', space=vmem, size = 0x20000, scoped, tag = 'output window, operand 0']
    #allocation4 [shape = 's32[2]{0}', space=sflag, size = 0x8, scoped, tag = 'scoped memory for matmul_bn.1']
    %9 = vsyncpa [#allocation4], 0
    %s10 = scalar_lea.sflag [#allocation4], 1
    %11 = vsyncpa %s10, 0
    loop: start=0, step=1, limit=10
    $region2: #{matmul_bn.1} parent=1 // loop_pre_header
      _
    $region3: #{matmul_bn.1} parent=1 // loop_header
      %s13 = sphi 0, %s17
      %p14 = scmp.ge.s32.totalorder %s13, 10
      %s20 = sphi 0, %s39
      %s21 = sphi 0, %s35
      %s22 = sphi 0, %s31
      %s23 = sphi 0, %s20
      %s24 = sphi 0, %s21
      %s25 = sphi 0, %s22
      %s26 = sphi 0, %s23
      %s27 = sphi 0, %s24
      %s28 = sphi 0, %s25
      %s44 = sphi 0, %s46
      %s47 = sphi 0, %s44
      %s48 = sphi 0, %s47
      %s64 = sphi 0, %s48
      %s72 = sphi 0, %s74
      %s75 = sphi 0, %s72
      %s76 = sphi 0, %s75
      %s92 = sphi 0, %s76
      %s98 = sphi 0, %s100
      %s101 = sphi 0, %s98
      %s102 = sphi 0, %s101
      %s118 = sphi 0, %s102
      %s124 = sphi 0, %s126
      %s127 = sphi 0, %s124
      %s128 = sphi 0, %s127
      %s144 = sphi 0, %s128
      %s152 = sphi 0, %s154
      %s155 = sphi 0, %s152
      %s156 = sphi 0, %s155
      %s172 = sphi 0, %s156
    $region4: #{matmul_bn.1} parent=1 // loop_header_branch
      %16 = sbr.rel (%p14) target = $region8
    $region5: #{matmul_bn.1} parent=1 // loop_body
      %s18 = ssub.s32 %s13, 1
      %s19 = ssub.s32 %s13, 2
      %s29 = sadd.s32 1, %s22
      %p30 = scmp.ge.s32.totalorder %s29, 1
      %s31 = scalar_select %p30, 0, %s29
      %s32 = sadd.s32 1, %s21
      %s33 = scalar_select %p30, %s32, %s21
      %p34 = scmp.ge.s32.totalorder %s33, 1
      %s35 = scalar_select %p34, 0, %s33
      %s36 = sadd.s32 1, %s20
      %s37 = scalar_select %p34, %s36, %s20
      %p38 = scmp.ge.s32.totalorder %s37, 8
      %s39 = scalar_select %p38, 0, %s37
      %s40 = ssub.s32 %s20, %s39
      %s41 = ssub.s32 %s22, %s31
      %s42 = sor.u32 %s40, %s41
      %p43 = scmp.eq.s32.totalorder %s42, 0
      %s45 = sadd.s32 %s44, 1
      %s46 = scalar_select %p43, %s44, %s45
      %p49 = pneg %p43
      %p50 = scmp.eq.s32.totalorder %s13, 7
      %p51 = por %p49, %p50
      %p52 = scmp.ne.s32.totalorder %s44, %s47
      %p53 = scmp.eq.s32.totalorder %s13, 0
      %p54 = por %p52, %p53
      %p55 = scmp.ne.s32.totalorder %s44, %s47
      %p56 = scmp.eq.s32.totalorder %s18, 7
      %p57 = por %p55, %p56
      %p58 = scmp.ne.s32.totalorder %s47, %s48
      %p59 = scmp.eq.s32.totalorder %s18, 0
      %p60 = por %p58, %p59
      %p61 = scmp.ne.s32.totalorder %s47, %s48
      %p62 = scmp.eq.s32.totalorder %s19, 7
      %p63 = por %p61, %p62
      %p65 = scmp.ne.s32.totalorder %s48, %s64
      %p66 = scmp.eq.s32.totalorder %s19, 0
      %p67 = por %p65, %p66
      %s68 = ssub.s32 %s22, %s31
      %s69 = ssub.s32 %s21, %s35
      %s70 = sor.u32 %s68, %s69
      %p71 = scmp.eq.s32.totalorder %s70, 0
      %s73 = sadd.s32 %s72, 1
      %s74 = scalar_select %p71, %s72, %s73
      %p77 = pneg %p71
      %p78 = scmp.eq.s32.totalorder %s13, 7
      %p79 = por %p77, %p78
      %p80 = scmp.ne.s32.totalorder %s72, %s75
      %p81 = scmp.eq.s32.totalorder %s13, 0
      %p82 = por %p80, %p81
      %p83 = scmp.ne.s32.totalorder %s72, %s75
      %p84 = scmp.eq.s32.totalorder %s18, 7
      %p85 = por %p83, %p84
      %p86 = scmp.ne.s32.totalorder %s75, %s76
      %p87 = scmp.eq.s32.totalorder %s18, 0
      %p88 = por %p86, %p87
      %p89 = scmp.ne.s32.totalorder %s75, %s76
      %p90 = scmp.eq.s32.totalorder %s19, 7
      %p91 = por %p89, %p90
      %p93 = scmp.ne.s32.totalorder %s76, %s92
      %p94 = scmp.eq.s32.totalorder %s19, 0
      %p95 = por %p93, %p94
      %s96 = ssub.s32 %s21, %s35
      %p97 = scmp.eq.s32.totalorder %s96, 0
      %s99 = sadd.s32 %s98, 1
      %s100 = scalar_select %p97, %s98, %s99
      %p103 = pneg %p97
      %p104 = scmp.eq.s32.totalorder %s13, 7
      %p105 = por %p103, %p104
      %p106 = scmp.ne.s32.totalorder %s98, %s101
      %p107 = scmp.eq.s32.totalorder %s13, 0
      %p108 = por %p106, %p107
      %p109 = scmp.ne.s32.totalorder %s98, %s101
      %p110 = scmp.eq.s32.totalorder %s18, 7
      %p111 = por %p109, %p110
      %p112 = scmp.ne.s32.totalorder %s101, %s102
      %p113 = scmp.eq.s32.totalorder %s18, 0
      %p114 = por %p112, %p113
      %p115 = scmp.ne.s32.totalorder %s101, %s102
      %p116 = scmp.eq.s32.totalorder %s19, 7
      %p117 = por %p115, %p116
      %p119 = scmp.ne.s32.totalorder %s102, %s118
      %p120 = scmp.eq.s32.totalorder %s19, 0
      %p121 = por %p119, %p120
      %s122 = ssub.s32 %s21, %s35
      %p123 = scmp.eq.s32.totalorder %s122, 0
      %s125 = sadd.s32 %s124, 1
      %s126 = scalar_select %p123, %s124, %s125
      %p129 = pneg %p123
      %p130 = scmp.eq.s32.totalorder %s13, 7
      %p131 = por %p129, %p130
      %p132 = scmp.ne.s32.totalorder %s124, %s127
      %p133 = scmp.eq.s32.totalorder %s13, 0
      %p134 = por %p132, %p133
      %p135 = scmp.ne.s32.totalorder %s124, %s127
      %p136 = scmp.eq.s32.totalorder %s18, 7
      %p137 = por %p135, %p136
      %p138 = scmp.ne.s32.totalorder %s127, %s128
      %p139 = scmp.eq.s32.totalorder %s18, 0
      %p140 = por %p138, %p139
      %p141 = scmp.ne.s32.totalorder %s127, %s128
      %p142 = scmp.eq.s32.totalorder %s19, 7
      %p143 = por %p141, %p142
      %p145 = scmp.ne.s32.totalorder %s128, %s144
      %p146 = scmp.eq.s32.totalorder %s19, 0
      %p147 = por %p145, %p146
      %s148 = ssub.s32 %s20, %s39
      %s149 = ssub.s32 %s21, %s35
      %s150 = sor.u32 %s148, %s149
      %p151 = scmp.eq.s32.totalorder %s150, 0
      %s153 = sadd.s32 %s152, 1
      %s154 = scalar_select %p151, %s152, %s153
      %p157 = pneg %p151
      %p158 = scmp.eq.s32.totalorder %s13, 7
      %p159 = por %p157, %p158
      %p160 = scmp.ne.s32.totalorder %s152, %s155
      %p161 = scmp.eq.s32.totalorder %s13, 0
      %p162 = por %p160, %p161
      %p163 = scmp.ne.s32.totalorder %s152, %s155
      %p164 = scmp.eq.s32.totalorder %s18, 7
      %p165 = por %p163, %p164
      %p166 = scmp.ne.s32.totalorder %s155, %s156
      %p167 = scmp.eq.s32.totalorder %s18, 0
      %p168 = por %p166, %p167
      %p169 = scmp.ne.s32.totalorder %s155, %s156
      %p170 = scmp.eq.s32.totalorder %s19, 7
      %p171 = por %p169, %p170
      %p173 = scmp.ne.s32.totalorder %s156, %s172
      %p174 = scmp.eq.s32.totalorder %s19, 0
      %p175 = por %p173, %p174
      %p176 = scmp.le.s32.totalorder 1, %s13
      %p177 = scmp.lt.s32.totalorder %s13, 9
      %p178 = pnand %p176, %p177
      %p179 = pneg %p178
      // Predicated region
      $region9: #{matmul_bn.1} parent=5 // pred_check
        _
      $region10: #{matmul_bn.1} parent=5 // pred_check_branch
        %181 = sbr.rel (%p178) target = $region12
      $region11: #{matmul_bn.1} parent=5 // pred_region
        %s182 = ssub.s32 %s13, 1
        // Predicated region
        $region13: #{matmul_bn.1} parent=11 // pred_check
          %p183 = pneg %p88
        $region14: #{matmul_bn.1} parent=11 // pred_check_branch
          %185 = sbr.rel (%p183) target = $region16
        $region15: #{matmul_bn.1} parent=11 // pred_region
          %s186 = smul.u32 32, %s25
          %p187 = scmp.lt.s32.totalorder %s186, 31
          %s188 = scalar_select %p187, %s186, 31
          %p189 = scmp.lt.s32.totalorder %s24, 0
          %s190 = scalar_select %p189, %s24, 0
          %s191 = sadd.s32 %s190, %s188
          %s192 = smul.addr %s191, 4
          %s193 = scalar_lea.vmem %s1, %s192
          %s194 = smul.u32 32, %s25
        $region16: #{matmul_bn.1} parent=11 // pred_fallthru
          _
        // Predicated region
        $region17: #{matmul_bn.1} parent=11 // pred_check
          %p195 = pneg %p114
        $region18: #{matmul_bn.1} parent=11 // pred_check_branch
          %197 = sbr.rel (%p195) target = $region20
        $region19: #{matmul_bn.1} parent=11 // pred_region
          %p198 = scmp.lt.s32.totalorder %s24, 0
          %s199 = scalar_select %p198, %s24, 0
          %s200 = scalar_lea.vmem %s2, %s199
        $region20: #{matmul_bn.1} parent=11 // pred_fallthru
          _
        // Predicated region
        $region21: #{matmul_bn.1} parent=11 // pred_check
          %p201 = pneg %p140
        $region22: #{matmul_bn.1} parent=11 // pred_check_branch
          %203 = sbr.rel (%p201) target = $region24
        $region23: #{matmul_bn.1} parent=11 // pred_region
          %p204 = scmp.lt.s32.totalorder %s24, 0
          %s205 = scalar_select %p204, %s24, 0
          %s206 = scalar_lea.vmem %s3, %s205
        $region24: #{matmul_bn.1} parent=11 // pred_fallthru
          _
      $region12: #{matmul_bn.1} parent=5 // pred_fallthru
        _
      %p207 = scmp.lt.s32.totalorder %s13, 8
      // Predicated region
      $region25: #{matmul_bn.1} parent=5 // pred_check
        %p208 = pneg %p207
      $region26: #{matmul_bn.1} parent=5 // pred_check_branch
        %210 = sbr.rel (%p208) target = $region28
      $region27: #{matmul_bn.1} parent=5 // pred_region
        // Predicated region
        $region29: #{matmul_bn.1} parent=27 // pred_check
          %p211 = pneg %p54
        $region30: #{matmul_bn.1} parent=27 // pred_check_branch
          %213 = sbr.rel (%p211) target = $region32
        $region31: #{matmul_bn.1} parent=27 // pred_region
          %s214 = smul.u32 32, %s20
          %s215 = smul.u32 2, %s22
          %p216 = scmp.lt.s32.totalorder %s214, 255
          %s217 = scalar_select %p216, %s214, 255
          %p218 = scmp.lt.s32.totalorder %s215, 1
          %s219 = scalar_select %p218, %s215, 1
          %s220 = smul.addr %s217, 2
          %s221 = sadd.s32 %s219, %s220
          %s222 = smul.addr %s221, 4
          %s223 = scalar_lea.vmem %s0, %s222
          %s224 = smul.u32 32, %s20
          %s225 = smul.u32 2, %s22
        $region32: #{matmul_bn.1} parent=27 // pred_fallthru
          _
      $region28: #{matmul_bn.1} parent=5 // pred_fallthru
        _
      %p226 = scmp.le.s32.totalorder 1, %s13
      %p227 = scmp.lt.s32.totalorder %s13, 9
      %p228 = pnand %p226, %p227
      %p229 = pneg %p228
      // Predicated region
      $region33: #{matmul_bn.1} parent=5 // pred_check
        _
      $region34: #{matmul_bn.1} parent=5 // pred_check_branch
        %231 = sbr.rel (%p228) target = $region36
      $region35: #{matmul_bn.1} parent=5 // pred_region
        %s232 = ssub.s32 %s13, 1
        %s233 = smul.u32 32, %s23
        %s234 = smul.u32 2, %s25
        %p235 = scmp.lt.s32.totalorder %s233, 255
        %s236 = scalar_select %p235, %s233, 255
        %p237 = scmp.lt.s32.totalorder %s234, 1
        %s238 = scalar_select %p237, %s234, 1
        %s239 = smul.addr %s236, 2
        %s240 = sadd.s32 %s238, %s239
        %s241 = smul.addr %s240, 4
        %s242 = scalar_lea.vmem %s0, %s241
        %p243 = pneg %p60
        %p244 = pneg %p57
        %s245 = smul.u32 32, %s25
        %p246 = scmp.lt.s32.totalorder %s245, 31
        %s247 = scalar_select %p246, %s245, 31
        %p248 = scmp.lt.s32.totalorder %s24, 0
        %s249 = scalar_select %p248, %s24, 0
        %s250 = sadd.s32 %s249, %s247
        %s251 = smul.addr %s250, 4
        %s252 = scalar_lea.vmem %s1, %s251
        %p253 = pneg %p88
        %p254 = pneg %p85
        %p255 = scmp.lt.s32.totalorder %s24, 0
        %s256 = scalar_select %p255, %s24, 0
        %s257 = scalar_lea.vmem %s2, %s256
        %p258 = pneg %p114
        %p259 = pneg %p111
        %p260 = scmp.lt.s32.totalorder %s24, 0
        %s261 = scalar_select %p260, %s24, 0
        %s262 = scalar_lea.vmem %s3, %s261
        %p263 = pneg %p140
        %p264 = pneg %p137
        %p265 = pneg %p168
        %p266 = pneg %p165
        %s267 = sand.u32 %s155, 1
        %s268 = scalar_lea.sflag [#allocation4], %s267
        %s269 = sand.u32 %s155, 1
        %s270 = smul.addr %s269, 128
        %s271 = scalar_lea.vmem [#allocation3], %s270
        %s272 = smul.u32 32, %s23
        %s273 = smul.u32 2, %s25
        %p274 = scmp.lt.s32.totalorder %s272, 255
        %s275 = scalar_select %p274, %s272, 255
        %p276 = scmp.lt.s32.totalorder %s273, 1
        %s277 = scalar_select %p276, %s273, 1
        %s278 = smul.addr %s275, 2
        %s279 = sadd.s32 %s277, %s278
        %s280 = smul.addr %s279, 4
        %s281 = scalar_lea.vmem %s0, %s280
        %s282 = smul.u32 32, %s23
        %s283 = smul.u32 2, %s25
        %s284 = smul.u32 32, %s25
        %p285 = scmp.lt.s32.totalorder %s284, 31
        %s286 = scalar_select %p285, %s284, 31
        %p287 = scmp.lt.s32.totalorder %s24, 0
        %s288 = scalar_select %p287, %s24, 0
        %s289 = sadd.s32 %s288, %s286
        %s290 = smul.addr %s289, 4
        %s291 = scalar_lea.vmem %s1, %s290
        %s292 = smul.u32 32, %s25
        %p293 = scmp.lt.s32.totalorder %s24, 0
        %s294 = scalar_select %p293, %s24, 0
        %s295 = scalar_lea.vmem %s2, %s294
        %p296 = scmp.lt.s32.totalorder %s24, 0
        %s297 = scalar_select %p296, %s24, 0
        %s298 = scalar_lea.vmem %s3, %s297
        %s299 = smul.u32 32, %s23
        %v301 = vld [vmem:[%s281] sm:$0xff]
        %v302 = vld [vmem:[%s281 + $0x8] sm:$0xff]
        %v303 = vld [vmem:[%s281 + $0x10] sm:$0xff]
        %v304 = vld [vmem:[%s281 + $0x18] sm:$0xff]
        %v305 = vld [vmem:[%s281 + $0x20] sm:$0xff]
        %v306 = vld [vmem:[%s281 + $0x28] sm:$0xff]
        %v307 = vld [vmem:[%s281 + $0x30] sm:$0xff]
        %v308 = vld [vmem:[%s281 + $0x38] sm:$0xff]
        %v309 = vld [vmem:[%s281 + $0x40] sm:$0xff]
        %v310 = vld [vmem:[%s281 + $0x48] sm:$0xff]
        %v311 = vld [vmem:[%s281 + $0x50] sm:$0xff]
        %v312 = vld [vmem:[%s281 + $0x58] sm:$0xff]
        %v313 = vld [vmem:[%s281 + $0x60] sm:$0xff]
        %v314 = vld [vmem:[%s281 + $0x68] sm:$0xff]
        %v315 = vld [vmem:[%s281 + $0x70] sm:$0xff]
        %v316 = vld [vmem:[%s281 + $0x78] sm:$0xff]
        %v317 = vld [vmem:[%s281 + $0x80] sm:$0xff]
        %v318 = vld [vmem:[%s281 + $0x88] sm:$0xff]
        %v319 = vld [vmem:[%s281 + $0x90] sm:$0xff]
        %v320 = vld [vmem:[%s281 + $0x98] sm:$0xff]
        %v321 = vld [vmem:[%s281 + $0xa0] sm:$0xff]
        %v322 = vld [vmem:[%s281 + $0xa8] sm:$0xff]
        %v323 = vld [vmem:[%s281 + $0xb0] sm:$0xff]
        %v324 = vld [vmem:[%s281 + $0xb8] sm:$0xff]
        %v325 = vld [vmem:[%s281 + $0xc0] sm:$0xff]
        %v326 = vld [vmem:[%s281 + $0xc8] sm:$0xff]
        %v327 = vld [vmem:[%s281 + $0xd0] sm:$0xff]
        %v328 = vld [vmem:[%s281 + $0xd8] sm:$0xff]
        %v329 = vld [vmem:[%s281 + $0xe0] sm:$0xff]
        %v330 = vld [vmem:[%s281 + $0xe8] sm:$0xff]
        %v331 = vld [vmem:[%s281 + $0xf0] sm:$0xff]
        %v332 = vld [vmem:[%s281 + $0xf8] sm:$0xff]
        %v333 = vld [vmem:[%s291] sm:$0xf]
        %v334 = vld [vmem:[%s291 + $0x4] sm:$0xf]
        %v335 = vld [vmem:[%s291 + $0x8] sm:$0xf]
        %v336 = vld [vmem:[%s291 + $0xc] sm:$0xf]
        %v337 = vld [vmem:[%s291 + $0x10] sm:$0xf]
        %v338 = vld [vmem:[%s291 + $0x14] sm:$0xf]
        %v339 = vld [vmem:[%s291 + $0x18] sm:$0xf]
        %v340 = vld [vmem:[%s291 + $0x1c] sm:$0xf]
        %v341 = vld [vmem:[%s291 + $0x20] sm:$0xf]
        %v342 = vld [vmem:[%s291 + $0x24] sm:$0xf]
        %v343 = vld [vmem:[%s291 + $0x28] sm:$0xf]
        %v344 = vld [vmem:[%s291 + $0x2c] sm:$0xf]
        %v345 = vld [vmem:[%s291 + $0x30] sm:$0xf]
        %v346 = vld [vmem:[%s291 + $0x34] sm:$0xf]
        %v347 = vld [vmem:[%s291 + $0x38] sm:$0xf]
        %v348 = vld [vmem:[%s291 + $0x3c] sm:$0xf]
        %v349 = vld [vmem:[%s291 + $0x40] sm:$0xf]
        %v350 = vld [vmem:[%s291 + $0x44] sm:$0xf]
        %v351 = vld [vmem:[%s291 + $0x48] sm:$0xf]
        %v352 = vld [vmem:[%s291 + $0x4c] sm:$0xf]
        %v353 = vld [vmem:[%s291 + $0x50] sm:$0xf]
        %v354 = vld [vmem:[%s291 + $0x54] sm:$0xf]
        %v355 = vld [vmem:[%s291 + $0x58] sm:$0xf]
        %v356 = vld [vmem:[%s291 + $0x5c] sm:$0xf]
        %v357 = vld [vmem:[%s291 + $0x60] sm:$0xf]
        %v358 = vld [vmem:[%s291 + $0x64] sm:$0xf]
        %v359 = vld [vmem:[%s291 + $0x68] sm:$0xf]
        %v360 = vld [vmem:[%s291 + $0x6c] sm:$0xf]
        %v361 = vld [vmem:[%s291 + $0x70] sm:$0xf]
        %v362 = vld [vmem:[%s291 + $0x74] sm:$0xf]
        %v363 = vld [vmem:[%s291 + $0x78] sm:$0xf]
        %v364 = vld [vmem:[%s291 + $0x7c] sm:$0xf]
        %v397 = vunpack.c.l.b16 %v301
        %v398 = vunpack.c.h.b16 %v301
        %v399 = vunpack.c.l.b16 %v302
        %v400 = vunpack.c.h.b16 %v302
        %v401 = vunpack.c.l.b16 %v303
        %v402 = vunpack.c.h.b16 %v303
        %v403 = vunpack.c.l.b16 %v304
        %v404 = vunpack.c.h.b16 %v304
        %v405 = vunpack.c.l.b16 %v305
        %v406 = vunpack.c.h.b16 %v305
        %v407 = vunpack.c.l.b16 %v306
        %v408 = vunpack.c.h.b16 %v306
        %v409 = vunpack.c.l.b16 %v307
        %v410 = vunpack.c.h.b16 %v307
        %v411 = vunpack.c.l.b16 %v308
        %v412 = vunpack.c.h.b16 %v308
        %v413 = vunpack.c.l.b16 %v309
        %v414 = vunpack.c.h.b16 %v309
        %v415 = vunpack.c.l.b16 %v310
        %v416 = vunpack.c.h.b16 %v310
        %v417 = vunpack.c.l.b16 %v311
        %v418 = vunpack.c.h.b16 %v311
        %v419 = vunpack.c.l.b16 %v312
        %v420 = vunpack.c.h.b16 %v312
        %v421 = vunpack.c.l.b16 %v313
        %v422 = vunpack.c.h.b16 %v313
        %v423 = vunpack.c.l.b16 %v314
        %v424 = vunpack.c.h.b16 %v314
        %v425 = vunpack.c.l.b16 %v315
        %v426 = vunpack.c.h.b16 %v315
        %v427 = vunpack.c.l.b16 %v316
        %v428 = vunpack.c.h.b16 %v316
        %v429 = vunpack.c.l.b16 %v317
        %v430 = vunpack.c.h.b16 %v317
        %v431 = vunpack.c.l.b16 %v318
        %v432 = vunpack.c.h.b16 %v318
        %v433 = vunpack.c.l.b16 %v319
        %v434 = vunpack.c.h.b16 %v319
        %v435 = vunpack.c.l.b16 %v320
        %v436 = vunpack.c.h.b16 %v320
        %v437 = vunpack.c.l.b16 %v321
        %v438 = vunpack.c.h.b16 %v321
        %v439 = vunpack.c.l.b16 %v322
        %v440 = vunpack.c.h.b16 %v322
        %v441 = vunpack.c.l.b16 %v323
        %v442 = vunpack.c.h.b16 %v323
        %v443 = vunpack.c.l.b16 %v324
        %v444 = vunpack.c.h.b16 %v324
        %v445 = vunpack.c.l.b16 %v325
        %v446 = vunpack.c.h.b16 %v325
        %v447 = vunpack.c.l.b16 %v326
        %v448 = vunpack.c.h.b16 %v326
        %v449 = vunpack.c.l.b16 %v327
        %v450 = vunpack.c.h.b16 %v327
        %v451 = vunpack.c.l.b16 %v328
        %v452 = vunpack.c.h.b16 %v328
        %v453 = vunpack.c.l.b16 %v329
        %v454 = vunpack.c.h.b16 %v329
        %v455 = vunpack.c.l.b16 %v330
        %v456 = vunpack.c.h.b16 %v330
        %v457 = vunpack.c.l.b16 %v331
        %v458 = vunpack.c.h.b16 %v331
        %v459 = vunpack.c.l.b16 %v332
        %v460 = vunpack.c.h.b16 %v332
        %v461 = vpack.c.b16 %v399, %v397
        %v462 = vpack.c.b16 %v400, %v398
        %v463 = vpack.c.b16 %v403, %v401
        %v464 = vpack.c.b16 %v404, %v402
        %v465 = vpack.c.b16 %v407, %v405
        %v466 = vpack.c.b16 %v408, %v406
        %v467 = vpack.c.b16 %v411, %v409
        %v468 = vpack.c.b16 %v412, %v410
        %v469 = vpack.c.b16 %v415, %v413
        %v470 = vpack.c.b16 %v416, %v414
        %v471 = vpack.c.b16 %v419, %v417
        %v472 = vpack.c.b16 %v420, %v418
        %v473 = vpack.c.b16 %v423, %v421
        %v474 = vpack.c.b16 %v424, %v422
        %v475 = vpack.c.b16 %v427, %v425
        %v476 = vpack.c.b16 %v428, %v426
        %v477 = vpack.c.b16 %v431, %v429
        %v478 = vpack.c.b16 %v432, %v430
        %v479 = vpack.c.b16 %v435, %v433
        %v480 = vpack.c.b16 %v436, %v434
        %v481 = vpack.c.b16 %v439, %v437
        %v482 = vpack.c.b16 %v440, %v438
        %v483 = vpack.c.b16 %v443, %v441
        %v484 = vpack.c.b16 %v444, %v442
        %v485 = vpack.c.b16 %v447, %v445
        %v486 = vpack.c.b16 %v448, %v446
        %v487 = vpack.c.b16 %v451, %v449
        %v488 = vpack.c.b16 %v452, %v450
        %v489 = vpack.c.b16 %v455, %v453
        %v490 = vpack.c.b16 %v456, %v454
        %v491 = vpack.c.b16 %v459, %v457
        %v492 = vpack.c.b16 %v460, %v458
        %v557 = vunpack.c.l.b16 %v333
        %v558 = vunpack.c.l.b16 %v334
        %v559 = vunpack.c.l.b16 %v335
        %v560 = vunpack.c.l.b16 %v336
        %v561 = vunpack.c.l.b16 %v337
        %v562 = vunpack.c.l.b16 %v338
        %v563 = vunpack.c.l.b16 %v339
        %v564 = vunpack.c.l.b16 %v340
        %v565 = vunpack.c.l.b16 %v341
        %v566 = vunpack.c.l.b16 %v342
        %v567 = vunpack.c.l.b16 %v343
        %v568 = vunpack.c.l.b16 %v344
        %v569 = vunpack.c.l.b16 %v345
        %v570 = vunpack.c.l.b16 %v346
        %v571 = vunpack.c.l.b16 %v347
        %v572 = vunpack.c.l.b16 %v348
        %v573 = vunpack.c.l.b16 %v349
        %v574 = vunpack.c.l.b16 %v350
        %v575 = vunpack.c.l.b16 %v351
        %v576 = vunpack.c.l.b16 %v352
        %v577 = vunpack.c.l.b16 %v353
        %v578 = vunpack.c.l.b16 %v354
        %v579 = vunpack.c.l.b16 %v355
        %v580 = vunpack.c.l.b16 %v356
        %v581 = vunpack.c.l.b16 %v357
        %v582 = vunpack.c.l.b16 %v358
        %v583 = vunpack.c.l.b16 %v359
        %v584 = vunpack.c.l.b16 %v360
        %v585 = vunpack.c.l.b16 %v361
        %v586 = vunpack.c.l.b16 %v362
        %v587 = vunpack.c.l.b16 %v363
        %v588 = vunpack.c.l.b16 %v364
        %v589 = vpack.c.b16 %v558, %v557
        %v590 = vpack.c.b16 %v560, %v559
        %v591 = vpack.c.b16 %v562, %v561
        %v592 = vpack.c.b16 %v564, %v563
        %v593 = vpack.c.b16 %v566, %v565
        %v594 = vpack.c.b16 %v568, %v567
        %v595 = vpack.c.b16 %v570, %v569
        %v596 = vpack.c.b16 %v572, %v571
        %v597 = vpack.c.b16 %v574, %v573
        %v598 = vpack.c.b16 %v576, %v575
        %v599 = vpack.c.b16 %v578, %v577
        %v600 = vpack.c.b16 %v580, %v579
        %v601 = vpack.c.b16 %v582, %v581
        %v602 = vpack.c.b16 %v584, %v583
        %v603 = vpack.c.b16 %v586, %v585
        %v604 = vpack.c.b16 %v588, %v587
        %621 = vmatprep.subr.bf16.mxu0 0
        %622 = vmatpush1.bf16.msra.mxu0 %v596
        %623 = vmatprep.subr.bf16.mxu0 0
        %624 = vmatpush1.bf16.msra.mxu0 %v595
        %625 = vmatprep.subr.bf16.mxu0 0
        %626 = vmatpush1.bf16.msra.mxu0 %v594
        %627 = vmatprep.subr.bf16.mxu0 0
        %628 = vmatpush1.bf16.msra.mxu0 %v593
        %629 = vmatprep.subr.bf16.mxu0 0
        %630 = vmatpush1.bf16.msra.mxu0 %v592
        %631 = vmatprep.subr.bf16.mxu0 0
        %632 = vmatpush1.bf16.msra.mxu0 %v591
        %633 = vmatprep.subr.bf16.mxu0 0
        %634 = vmatpush1.bf16.msra.mxu0 %v590
        %635 = vmatprep.subr.bf16.mxu0 0
        %636 = vmatpush1.bf16.msra.mxu0 %v589
        %637 = vmatprep.subr.bf16.mxu0 0
        %638 = vmatpush2.bf16.msra.mxu0 %v604
        %639 = vmatprep.subr.bf16.mxu0 0
        %640 = vmatpush2.bf16.msra.mxu0 %v603
        %641 = vmatprep.subr.bf16.mxu0 0
        %642 = vmatpush2.bf16.msra.mxu0 %v602
        %643 = vmatprep.subr.bf16.mxu0 0
        %644 = vmatpush2.bf16.msra.mxu0 %v601
        %645 = vmatprep.subr.bf16.mxu0 0
        %646 = vmatpush2.bf16.msra.mxu0 %v600
        %647 = vmatprep.subr.bf16.mxu0 0
        %648 = vmatpush2.bf16.msra.mxu0 %v599
        %649 = vmatprep.subr.bf16.mxu0 0
        %650 = vmatpush2.bf16.msra.mxu0 %v598
        %651 = vmatprep.subr.bf16.mxu0 0
        %652 = vmatpush2.bf16.msra.mxu0 %v597
        %653 = vmatprep.mubr.bf16.mxu0 %v462
        %654 = vmatmul.mubr.bf16.gmra.mxu0 %v461
        %v655 = vpop.f32.mrf.mxu0
        %v656 = vadd.f32 0.0, %v655
        %v657 = vpop.f32.mrf.mxu0
        %v658 = vpop.f32.mrf.mxu0
        %v659 = vadd.f32 0.0, %v658
        %v660 = vpop.f32.mrf.mxu0
        %661 = vmatprep.mubr.bf16.mxu0 %v464
        %662 = vmatmul.mubr.bf16.gmra.mxu0 %v463
        %v663 = vpop.f32.mrf.mxu0
        %v664 = vadd.f32 0.0, %v663
        %v665 = vpop.f32.mrf.mxu0
        %v666 = vpop.f32.mrf.mxu0
        %v667 = vadd.f32 0.0, %v666
        %v668 = vpop.f32.mrf.mxu0
        %669 = vmatprep.mubr.bf16.mxu0 %v466
        %670 = vmatmul.mubr.bf16.gmra.mxu0 %v465
        %v671 = vpop.f32.mrf.mxu0
        %v672 = vadd.f32 0.0, %v671
        %v673 = vpop.f32.mrf.mxu0
        %v674 = vpop.f32.mrf.mxu0
        %v675 = vadd.f32 0.0, %v674
        %v676 = vpop.f32.mrf.mxu0
        %677 = vmatprep.mubr.bf16.mxu0 %v468
        %678 = vmatmul.mubr.bf16.gmra.mxu0 %v467
        %v679 = vpop.f32.mrf.mxu0
        %v680 = vadd.f32 0.0, %v679
        %v681 = vpop.f32.mrf.mxu0
        %v682 = vpop.f32.mrf.mxu0
        %v683 = vadd.f32 0.0, %v682
        %v684 = vpop.f32.mrf.mxu0
        %685 = vmatprep.mubr.bf16.mxu0 %v470
        %686 = vmatmul.mubr.bf16.gmra.mxu0 %v469
        %v687 = vpop.f32.mrf.mxu0
        %v688 = vadd.f32 0.0, %v687
        %v689 = vpop.f32.mrf.mxu0
        %v690 = vpop.f32.mrf.mxu0
        %v691 = vadd.f32 0.0, %v690
        %v692 = vpop.f32.mrf.mxu0
        %693 = vmatprep.mubr.bf16.mxu0 %v472
        %694 = vmatmul.mubr.bf16.gmra.mxu0 %v471
        %v695 = vpop.f32.mrf.mxu0
        %v696 = vadd.f32 0.0, %v695
        %v697 = vpop.f32.mrf.mxu0
        %v698 = vpop.f32.mrf.mxu0
        %v699 = vadd.f32 0.0, %v698
        %v700 = vpop.f32.mrf.mxu0
        %701 = vmatprep.mubr.bf16.mxu0 %v474
        %702 = vmatmul.mubr.bf16.gmra.mxu0 %v473
        %v703 = vpop.f32.mrf.mxu0
        %v704 = vadd.f32 0.0, %v703
        %v705 = vpop.f32.mrf.mxu0
        %v706 = vpop.f32.mrf.mxu0
        %v707 = vadd.f32 0.0, %v706
        %v708 = vpop.f32.mrf.mxu0
        %709 = vmatprep.mubr.bf16.mxu0 %v476
        %710 = vmatmul.mubr.bf16.gmra.mxu0 %v475
        %v711 = vpop.f32.mrf.mxu0
        %v712 = vadd.f32 0.0, %v711
        %v713 = vpop.f32.mrf.mxu0
        %v714 = vpop.f32.mrf.mxu0
        %v715 = vadd.f32 0.0, %v714
        %v716 = vpop.f32.mrf.mxu0
        %717 = vmatprep.mubr.bf16.mxu0 %v478
        %718 = vmatmul.mubr.bf16.gmra.mxu0 %v477
        %v719 = vpop.f32.mrf.mxu0
        %v720 = vadd.f32 0.0, %v719
        %v721 = vpop.f32.mrf.mxu0
        %v722 = vpop.f32.mrf.mxu0
        %v723 = vadd.f32 0.0, %v722
        %v724 = vpop.f32.mrf.mxu0
        %725 = vmatprep.mubr.bf16.mxu0 %v480
        %726 = vmatmul.mubr.bf16.gmra.mxu0 %v479
        %v727 = vpop.f32.mrf.mxu0
        %v728 = vadd.f32 0.0, %v727
        %v729 = vpop.f32.mrf.mxu0
        %v730 = vpop.f32.mrf.mxu0
        %v731 = vadd.f32 0.0, %v730
        %v732 = vpop.f32.mrf.mxu0
        %733 = vmatprep.mubr.bf16.mxu0 %v482
        %734 = vmatmul.mubr.bf16.gmra.mxu0 %v481
        %v735 = vpop.f32.mrf.mxu0
        %v736 = vadd.f32 0.0, %v735
        %v737 = vpop.f32.mrf.mxu0
        %v738 = vpop.f32.mrf.mxu0
        %v739 = vadd.f32 0.0, %v738
        %v740 = vpop.f32.mrf.mxu0
        %741 = vmatprep.mubr.bf16.mxu0 %v484
        %742 = vmatmul.mubr.bf16.gmra.mxu0 %v483
        %v743 = vpop.f32.mrf.mxu0
        %v744 = vadd.f32 0.0, %v743
        %v745 = vpop.f32.mrf.mxu0
        %v746 = vpop.f32.mrf.mxu0
        %v747 = vadd.f32 0.0, %v746
        %v748 = vpop.f32.mrf.mxu0
        %749 = vmatprep.mubr.bf16.mxu0 %v486
        %750 = vmatmul.mubr.bf16.gmra.mxu0 %v485
        %v751 = vpop.f32.mrf.mxu0
        %v752 = vadd.f32 0.0, %v751
        %v753 = vpop.f32.mrf.mxu0
        %v754 = vpop.f32.mrf.mxu0
        %v755 = vadd.f32 0.0, %v754
        %v756 = vpop.f32.mrf.mxu0
        %757 = vmatprep.mubr.bf16.mxu0 %v488
        %758 = vmatmul.mubr.bf16.gmra.mxu0 %v487
        %v759 = vpop.f32.mrf.mxu0
        %v760 = vadd.f32 0.0, %v759
        %v761 = vpop.f32.mrf.mxu0
        %v762 = vpop.f32.mrf.mxu0
        %v763 = vadd.f32 0.0, %v762
        %v764 = vpop.f32.mrf.mxu0
        %765 = vmatprep.mubr.bf16.mxu0 %v490
        %766 = vmatmul.mubr.bf16.gmra.mxu0 %v489
        %v767 = vpop.f32.mrf.mxu0
        %v768 = vadd.f32 0.0, %v767
        %v769 = vpop.f32.mrf.mxu0
        %v770 = vpop.f32.mrf.mxu0
        %v771 = vadd.f32 0.0, %v770
        %v772 = vpop.f32.mrf.mxu0
        %773 = vmatprep.mubr.bf16.mxu0 %v492
        %774 = vmatmul.mubr.bf16.gmra.mxu0 %v491
        %v775 = vpop.f32.mrf.mxu0
        %v776 = vadd.f32 0.0, %v775
        %v777 = vpop.f32.mrf.mxu0
        %v778 = vpop.f32.mrf.mxu0
        %v779 = vadd.f32 0.0, %v778
        %v780 = vpop.f32.mrf.mxu0
        %781 = vdwg.mxu0
        %p782 = scmp.eq.s32.totalorder %s25, 0
        // Predicated region
        $region37: #{matmul_bn.1} parent=35 // pred_check
          %p783 = pneg %p782
        $region38: #{matmul_bn.1} parent=35 // pred_check_branch
          %785 = sbr.rel (%p783) target = $region40
        $region39: #{matmul_bn.1} parent=35 // pred_region
          %786 = vst [vmem:[#allocation2] sm:$0xff] %v656
          %787 = vst [vmem:[#allocation2 + $0x8] sm:$0xff] %v659
          %788 = vst [vmem:[#allocation2 + $0x10] sm:$0xff] %v664
          %789 = vst [vmem:[#allocation2 + $0x18] sm:$0xff] %v667
          %790 = vst [vmem:[#allocation2 + $0x20] sm:$0xff] %v672
          %791 = vst [vmem:[#allocation2 + $0x28] sm:$0xff] %v675
          %792 = vst [vmem:[#allocation2 + $0x30] sm:$0xff] %v680
          %793 = vst [vmem:[#allocation2 + $0x38] sm:$0xff] %v683
          %794 = vst [vmem:[#allocation2 + $0x40] sm:$0xff] %v688
          %795 = vst [vmem:[#allocation2 + $0x48] sm:$0xff] %v691
          %796 = vst [vmem:[#allocation2 + $0x50] sm:$0xff] %v696
          %797 = vst [vmem:[#allocation2 + $0x58] sm:$0xff] %v699
          %798 = vst [vmem:[#allocation2 + $0x60] sm:$0xff] %v704
          %799 = vst [vmem:[#allocation2 + $0x68] sm:$0xff] %v707
          %800 = vst [vmem:[#allocation2 + $0x70] sm:$0xff] %v712
          %801 = vst [vmem:[#allocation2 + $0x78] sm:$0xff] %v715
          %802 = vst [vmem:[#allocation2 + $0x80] sm:$0xff] %v720
          %803 = vst [vmem:[#allocation2 + $0x88] sm:$0xff] %v723
          %804 = vst [vmem:[#allocation2 + $0x90] sm:$0xff] %v728
          %805 = vst [vmem:[#allocation2 + $0x98] sm:$0xff] %v731
          %806 = vst [vmem:[#allocation2 + $0xa0] sm:$0xff] %v736
          %807 = vst [vmem:[#allocation2 + $0xa8] sm:$0xff] %v739
          %808 = vst [vmem:[#allocation2 + $0xb0] sm:$0xff] %v744
          %809 = vst [vmem:[#allocation2 + $0xb8] sm:$0xff] %v747
          %810 = vst [vmem:[#allocation2 + $0xc0] sm:$0xff] %v752
          %811 = vst [vmem:[#allocation2 + $0xc8] sm:$0xff] %v755
          %812 = vst [vmem:[#allocation2 + $0xd0] sm:$0xff] %v760
          %813 = vst [vmem:[#allocation2 + $0xd8] sm:$0xff] %v763
          %814 = vst [vmem:[#allocation2 + $0xe0] sm:$0xff] %v768
          %815 = vst [vmem:[#allocation2 + $0xe8] sm:$0xff] %v771
          %816 = vst [vmem:[#allocation2 + $0xf0] sm:$0xff] %v776
          %817 = vst [vmem:[#allocation2 + $0xf8] sm:$0xff] %v779
        $region40: #{matmul_bn.1} parent=35 // pred_fallthru
          _
        %p818 = scmp.gt.s32.totalorder %s25, 0
        // Predicated region
        $region41: #{matmul_bn.1} parent=35 // pred_check
          %p819 = pneg %p818
        $region42: #{matmul_bn.1} parent=35 // pred_check_branch
          %821 = sbr.rel (%p819) target = $region44
        $region43: #{matmul_bn.1} parent=35 // pred_region
          %v822 = vld [vmem:[#allocation2] sm:$0xff]
          %v823 = vld [vmem:[#allocation2 + $0x8] sm:$0xff]
          %v824 = vld [vmem:[#allocation2 + $0x10] sm:$0xff]
          %v825 = vld [vmem:[#allocation2 + $0x18] sm:$0xff]
          %v826 = vld [vmem:[#allocation2 + $0x20] sm:$0xff]
          %v827 = vld [vmem:[#allocation2 + $0x28] sm:$0xff]
          %v828 = vld [vmem:[#allocation2 + $0x30] sm:$0xff]
          %v829 = vld [vmem:[#allocation2 + $0x38] sm:$0xff]
          %v830 = vld [vmem:[#allocation2 + $0x40] sm:$0xff]
          %v831 = vld [vmem:[#allocation2 + $0x48] sm:$0xff]
          %v832 = vld [vmem:[#allocation2 + $0x50] sm:$0xff]
          %v833 = vld [vmem:[#allocation2 + $0x58] sm:$0xff]
          %v834 = vld [vmem:[#allocation2 + $0x60] sm:$0xff]
          %v835 = vld [vmem:[#allocation2 + $0x68] sm:$0xff]
          %v836 = vld [vmem:[#allocation2 + $0x70] sm:$0xff]
          %v837 = vld [vmem:[#allocation2 + $0x78] sm:$0xff]
          %v838 = vld [vmem:[#allocation2 + $0x80] sm:$0xff]
          %v839 = vld [vmem:[#allocation2 + $0x88] sm:$0xff]
          %v840 = vld [vmem:[#allocation2 + $0x90] sm:$0xff]
          %v841 = vld [vmem:[#allocation2 + $0x98] sm:$0xff]
          %v842 = vld [vmem:[#allocation2 + $0xa0] sm:$0xff]
          %v843 = vld [vmem:[#allocation2 + $0xa8] sm:$0xff]
          %v844 = vld [vmem:[#allocation2 + $0xb0] sm:$0xff]
          %v845 = vld [vmem:[#allocation2 + $0xb8] sm:$0xff]
          %v846 = vld [vmem:[#allocation2 + $0xc0] sm:$0xff]
          %v847 = vld [vmem:[#allocation2 + $0xc8] sm:$0xff]
          %v848 = vld [vmem:[#allocation2 + $0xd0] sm:$0xff]
          %v849 = vld [vmem:[#allocation2 + $0xd8] sm:$0xff]
          %v850 = vld [vmem:[#allocation2 + $0xe0] sm:$0xff]
          %v851 = vld [vmem:[#allocation2 + $0xe8] sm:$0xff]
          %v852 = vld [vmem:[#allocation2 + $0xf0] sm:$0xff]
          %v853 = vld [vmem:[#allocation2 + $0xf8] sm:$0xff]
          %v854 = vadd.f32 %v822, %v656
          %v855 = vadd.f32 %v823, %v659
          %v856 = vadd.f32 %v824, %v664
          %v857 = vadd.f32 %v825, %v667
          %v858 = vadd.f32 %v826, %v672
          %v859 = vadd.f32 %v827, %v675
          %v860 = vadd.f32 %v828, %v680
          %v861 = vadd.f32 %v829, %v683
          %v862 = vadd.f32 %v830, %v688
          %v863 = vadd.f32 %v831, %v691
          %v864 = vadd.f32 %v832, %v696
          %v865 = vadd.f32 %v833, %v699
          %v866 = vadd.f32 %v834, %v704
          %v867 = vadd.f32 %v835, %v707
          %v868 = vadd.f32 %v836, %v712
          %v869 = vadd.f32 %v837, %v715
          %v870 = vadd.f32 %v838, %v720
          %v871 = vadd.f32 %v839, %v723
          %v872 = vadd.f32 %v840, %v728
          %v873 = vadd.f32 %v841, %v731
          %v874 = vadd.f32 %v842, %v736
          %v875 = vadd.f32 %v843, %v739
          %v876 = vadd.f32 %v844, %v744
          %v877 = vadd.f32 %v845, %v747
          %v878 = vadd.f32 %v846, %v752
          %v879 = vadd.f32 %v847, %v755
          %v880 = vadd.f32 %v848, %v760
          %v881 = vadd.f32 %v849, %v763
          %v882 = vadd.f32 %v850, %v768
          %v883 = vadd.f32 %v851, %v771
          %v884 = vadd.f32 %v852, %v776
          %v885 = vadd.f32 %v853, %v779
          %886 = vst [vmem:[#allocation2] sm:$0xff] %v854
          %887 = vst [vmem:[#allocation2 + $0x8] sm:$0xff] %v855
          %888 = vst [vmem:[#allocation2 + $0x10] sm:$0xff] %v856
          %889 = vst [vmem:[#allocation2 + $0x18] sm:$0xff] %v857
          %890 = vst [vmem:[#allocation2 + $0x20] sm:$0xff] %v858
          %891 = vst [vmem:[#allocation2 + $0x28] sm:$0xff] %v859
          %892 = vst [vmem:[#allocation2 + $0x30] sm:$0xff] %v860
          %893 = vst [vmem:[#allocation2 + $0x38] sm:$0xff] %v861
          %894 = vst [vmem:[#allocation2 + $0x40] sm:$0xff] %v862
          %895 = vst [vmem:[#allocation2 + $0x48] sm:$0xff] %v863
          %896 = vst [vmem:[#allocation2 + $0x50] sm:$0xff] %v864
          %897 = vst [vmem:[#allocation2 + $0x58] sm:$0xff] %v865
          %898 = vst [vmem:[#allocation2 + $0x60] sm:$0xff] %v866
          %899 = vst [vmem:[#allocation2 + $0x68] sm:$0xff] %v867
          %900 = vst [vmem:[#allocation2 + $0x70] sm:$0xff] %v868
          %901 = vst [vmem:[#allocation2 + $0x78] sm:$0xff] %v869
          %902 = vst [vmem:[#allocation2 + $0x80] sm:$0xff] %v870
          %903 = vst [vmem:[#allocation2 + $0x88] sm:$0xff] %v871
          %904 = vst [vmem:[#allocation2 + $0x90] sm:$0xff] %v872
          %905 = vst [vmem:[#allocation2 + $0x98] sm:$0xff] %v873
          %906 = vst [vmem:[#allocation2 + $0xa0] sm:$0xff] %v874
          %907 = vst [vmem:[#allocation2 + $0xa8] sm:$0xff] %v875
          %908 = vst [vmem:[#allocation2 + $0xb0] sm:$0xff] %v876
          %909 = vst [vmem:[#allocation2 + $0xb8] sm:$0xff] %v877
          %910 = vst [vmem:[#allocation2 + $0xc0] sm:$0xff] %v878
          %911 = vst [vmem:[#allocation2 + $0xc8] sm:$0xff] %v879
          %912 = vst [vmem:[#allocation2 + $0xd0] sm:$0xff] %v880
          %913 = vst [vmem:[#allocation2 + $0xd8] sm:$0xff] %v881
          %914 = vst [vmem:[#allocation2 + $0xe0] sm:$0xff] %v882
          %915 = vst [vmem:[#allocation2 + $0xe8] sm:$0xff] %v883
          %916 = vst [vmem:[#allocation2 + $0xf0] sm:$0xff] %v884
          %917 = vst [vmem:[#allocation2 + $0xf8] sm:$0xff] %v885
        $region44: #{matmul_bn.1} parent=35 // pred_fallthru
          _
        // Predicated region
        $region45: #{matmul_bn.1} parent=35 // pred_check
          %p918 = pneg %p782
        $region46: #{matmul_bn.1} parent=35 // pred_check_branch
          %920 = sbr.rel (%p918) target = $region48
        $region47: #{matmul_bn.1} parent=35 // pred_region
          %v921 = vld [vmem:[#allocation2] sm:$0xff]
          %v922 = vld [vmem:[#allocation2 + $0x8] sm:$0xff]
          %v923 = vld [vmem:[#allocation2 + $0x10] sm:$0xff]
          %v924 = vld [vmem:[#allocation2 + $0x18] sm:$0xff]
          %v925 = vld [vmem:[#allocation2 + $0x20] sm:$0xff]
          %v926 = vld [vmem:[#allocation2 + $0x28] sm:$0xff]
          %v927 = vld [vmem:[#allocation2 + $0x30] sm:$0xff]
          %v928 = vld [vmem:[#allocation2 + $0x38] sm:$0xff]
          %v929 = vld [vmem:[#allocation2 + $0x40] sm:$0xff]
          %v930 = vld [vmem:[#allocation2 + $0x48] sm:$0xff]
          %v931 = vld [vmem:[#allocation2 + $0x50] sm:$0xff]
          %v932 = vld [vmem:[#allocation2 + $0x58] sm:$0xff]
          %v933 = vld [vmem:[#allocation2 + $0x60] sm:$0xff]
          %v934 = vld [vmem:[#allocation2 + $0x68] sm:$0xff]
          %v935 = vld [vmem:[#allocation2 + $0x70] sm:$0xff]
          %v936 = vld [vmem:[#allocation2 + $0x78] sm:$0xff]
          %v937 = vld [vmem:[#allocation2 + $0x80] sm:$0xff]
          %v938 = vld [vmem:[#allocation2 + $0x88] sm:$0xff]
          %v939 = vld [vmem:[#allocation2 + $0x90] sm:$0xff]
          %v940 = vld [vmem:[#allocation2 + $0x98] sm:$0xff]
          %v941 = vld [vmem:[#allocation2 + $0xa0] sm:$0xff]
          %v942 = vld [vmem:[#allocation2 + $0xa8] sm:$0xff]
          %v943 = vld [vmem:[#allocation2 + $0xb0] sm:$0xff]
          %v944 = vld [vmem:[#allocation2 + $0xb8] sm:$0xff]
          %v945 = vld [vmem:[#allocation2 + $0xc0] sm:$0xff]
          %v946 = vld [vmem:[#allocation2 + $0xc8] sm:$0xff]
          %v947 = vld [vmem:[#allocation2 + $0xd0] sm:$0xff]
          %v948 = vld [vmem:[#allocation2 + $0xd8] sm:$0xff]
          %v949 = vld [vmem:[#allocation2 + $0xe0] sm:$0xff]
          %v950 = vld [vmem:[#allocation2 + $0xe8] sm:$0xff]
          %v951 = vld [vmem:[#allocation2 + $0xf0] sm:$0xff]
          %v952 = vld [vmem:[#allocation2 + $0xf8] sm:$0xff]
          %v953 = vld [vmem:[%s295] sm:$0x1]
          %v955 = vlaneseq
          %v956 = vshrl.u32 %v955, 7
          %v957 = vsub.s32 0, %v956
          %v958 = vrot.slane %v953, %v957
          %v960 = vmul.f32 %v921, %v958
          %v961 = vmul.f32 %v922, %v958
          %v962 = vmul.f32 %v923, %v958
          %v963 = vmul.f32 %v924, %v958
          %v964 = vmul.f32 %v925, %v958
          %v965 = vmul.f32 %v926, %v958
          %v966 = vmul.f32 %v927, %v958
          %v967 = vmul.f32 %v928, %v958
          %v968 = vmul.f32 %v929, %v958
          %v969 = vmul.f32 %v930, %v958
          %v970 = vmul.f32 %v931, %v958
          %v971 = vmul.f32 %v932, %v958
          %v972 = vmul.f32 %v933, %v958
          %v973 = vmul.f32 %v934, %v958
          %v974 = vmul.f32 %v935, %v958
          %v975 = vmul.f32 %v936, %v958
          %v976 = vmul.f32 %v937, %v958
          %v977 = vmul.f32 %v938, %v958
          %v978 = vmul.f32 %v939, %v958
          %v979 = vmul.f32 %v940, %v958
          %v980 = vmul.f32 %v941, %v958
          %v981 = vmul.f32 %v942, %v958
          %v982 = vmul.f32 %v943, %v958
          %v983 = vmul.f32 %v944, %v958
          %v984 = vmul.f32 %v945, %v958
          %v985 = vmul.f32 %v946, %v958
          %v986 = vmul.f32 %v947, %v958
          %v987 = vmul.f32 %v948, %v958
          %v988 = vmul.f32 %v949, %v958
          %v989 = vmul.f32 %v950, %v958
          %v990 = vmul.f32 %v951, %v958
          %v991 = vmul.f32 %v952, %v958
          %v992 = vld [vmem:[%s298] sm:$0x1]
          %v994 = vlaneseq
          %v995 = vshrl.u32 %v994, 7
          %v996 = vsub.s32 0, %v995
          %v997 = vrot.slane %v992, %v996
          %v999 = vadd.f32 %v960, %v997
          %v1000 = vadd.f32 %v961, %v997
          %v1001 = vadd.f32 %v962, %v997
          %v1002 = vadd.f32 %v963, %v997
          %v1003 = vadd.f32 %v964, %v997
          %v1004 = vadd.f32 %v965, %v997
          %v1005 = vadd.f32 %v966, %v997
          %v1006 = vadd.f32 %v967, %v997
          %v1007 = vadd.f32 %v968, %v997
          %v1008 = vadd.f32 %v969, %v997
          %v1009 = vadd.f32 %v970, %v997
          %v1010 = vadd.f32 %v971, %v997
          %v1011 = vadd.f32 %v972, %v997
          %v1012 = vadd.f32 %v973, %v997
          %v1013 = vadd.f32 %v974, %v997
          %v1014 = vadd.f32 %v975, %v997
          %v1015 = vadd.f32 %v976, %v997
          %v1016 = vadd.f32 %v977, %v997
          %v1017 = vadd.f32 %v978, %v997
          %v1018 = vadd.f32 %v979, %v997
          %v1019 = vadd.f32 %v980, %v997
          %v1020 = vadd.f32 %v981, %v997
          %v1021 = vadd.f32 %v982, %v997
          %v1022 = vadd.f32 %v983, %v997
          %v1023 = vadd.f32 %v984, %v997
          %v1024 = vadd.f32 %v985, %v997
          %v1025 = vadd.f32 %v986, %v997
          %v1026 = vadd.f32 %v987, %v997
          %v1027 = vadd.f32 %v988, %v997
          %v1028 = vadd.f32 %v989, %v997
          %v1029 = vadd.f32 %v990, %v997
          %v1030 = vadd.f32 %v991, %v997
          %v1031 = vpack.c.bf16 %v1000, %v999
          %v1032 = vpack.c.bf16 %v1002, %v1001
          %v1033 = vpack.c.bf16 %v1004, %v1003
          %v1034 = vpack.c.bf16 %v1006, %v1005
          %v1035 = vpack.c.bf16 %v1008, %v1007
          %v1036 = vpack.c.bf16 %v1010, %v1009
          %v1037 = vpack.c.bf16 %v1012, %v1011
          %v1038 = vpack.c.bf16 %v1014, %v1013
          %v1039 = vpack.c.bf16 %v1016, %v1015
          %v1040 = vpack.c.bf16 %v1018, %v1017
          %v1041 = vpack.c.bf16 %v1020, %v1019
          %v1042 = vpack.c.bf16 %v1022, %v1021
          %v1043 = vpack.c.bf16 %v1024, %v1023
          %v1044 = vpack.c.bf16 %v1026, %v1025
          %v1045 = vpack.c.bf16 %v1028, %v1027
          %v1046 = vpack.c.bf16 %v1030, %v1029
          %v1063 = vunpack.c.l.b16 %v1031
          %v1064 = vunpack.c.h.b16 %v1031
          %v1065 = vunpack.c.l.b16 %v1032
          %v1066 = vunpack.c.h.b16 %v1032
          %v1067 = vunpack.c.l.b16 %v1033
          %v1068 = vunpack.c.h.b16 %v1033
          %v1069 = vunpack.c.l.b16 %v1034
          %v1070 = vunpack.c.h.b16 %v1034
          %v1071 = vunpack.c.l.b16 %v1035
          %v1072 = vunpack.c.h.b16 %v1035
          %v1073 = vunpack.c.l.b16 %v1036
          %v1074 = vunpack.c.h.b16 %v1036
          %v1075 = vunpack.c.l.b16 %v1037
          %v1076 = vunpack.c.h.b16 %v1037
          %v1077 = vunpack.c.l.b16 %v1038
          %v1078 = vunpack.c.h.b16 %v1038
          %v1079 = vunpack.c.l.b16 %v1039
          %v1080 = vunpack.c.h.b16 %v1039
          %v1081 = vunpack.c.l.b16 %v1040
          %v1082 = vunpack.c.h.b16 %v1040
          %v1083 = vunpack.c.l.b16 %v1041
          %v1084 = vunpack.c.h.b16 %v1041
          %v1085 = vunpack.c.l.b16 %v1042
          %v1086 = vunpack.c.h.b16 %v1042
          %v1087 = vunpack.c.l.b16 %v1043
          %v1088 = vunpack.c.h.b16 %v1043
          %v1089 = vunpack.c.l.b16 %v1044
          %v1090 = vunpack.c.h.b16 %v1044
          %v1091 = vunpack.c.l.b16 %v1045
          %v1092 = vunpack.c.h.b16 %v1045
          %v1093 = vunpack.c.l.b16 %v1046
          %v1094 = vunpack.c.h.b16 %v1046
          %v1095 = vpack.c.b16 %v1063, %v1063
          %v1096 = vpack.c.b16 %v1064, %v1064
          %v1097 = vpack.c.b16 %v1065, %v1065
          %v1098 = vpack.c.b16 %v1066, %v1066
          %v1099 = vpack.c.b16 %v1067, %v1067
          %v1100 = vpack.c.b16 %v1068, %v1068
          %v1101 = vpack.c.b16 %v1069, %v1069
          %v1102 = vpack.c.b16 %v1070, %v1070
          %v1103 = vpack.c.b16 %v1071, %v1071
          %v1104 = vpack.c.b16 %v1072, %v1072
          %v1105 = vpack.c.b16 %v1073, %v1073
          %v1106 = vpack.c.b16 %v1074, %v1074
          %v1107 = vpack.c.b16 %v1075, %v1075
          %v1108 = vpack.c.b16 %v1076, %v1076
          %v1109 = vpack.c.b16 %v1077, %v1077
          %v1110 = vpack.c.b16 %v1078, %v1078
          %v1111 = vpack.c.b16 %v1079, %v1079
          %v1112 = vpack.c.b16 %v1080, %v1080
          %v1113 = vpack.c.b16 %v1081, %v1081
          %v1114 = vpack.c.b16 %v1082, %v1082
          %v1115 = vpack.c.b16 %v1083, %v1083
          %v1116 = vpack.c.b16 %v1084, %v1084
          %v1117 = vpack.c.b16 %v1085, %v1085
          %v1118 = vpack.c.b16 %v1086, %v1086
          %v1119 = vpack.c.b16 %v1087, %v1087
          %v1120 = vpack.c.b16 %v1088, %v1088
          %v1121 = vpack.c.b16 %v1089, %v1089
          %v1122 = vpack.c.b16 %v1090, %v1090
          %v1123 = vpack.c.b16 %v1091, %v1091
          %v1124 = vpack.c.b16 %v1092, %v1092
          %v1125 = vpack.c.b16 %v1093, %v1093
          %v1126 = vpack.c.b16 %v1094, %v1094
          %1159 = vst [vmem:[%s271] sm:$0xf] %v1095
          %1160 = vst [vmem:[%s271 + $0x4] sm:$0xf] %v1096
          %1161 = vst [vmem:[%s271 + $0x8] sm:$0xf] %v1097
          %1162 = vst [vmem:[%s271 + $0xc] sm:$0xf] %v1098
          %1163 = vst [vmem:[%s271 + $0x10] sm:$0xf] %v1099
          %1164 = vst [vmem:[%s271 + $0x14] sm:$0xf] %v1100
          %1165 = vst [vmem:[%s271 + $0x18] sm:$0xf] %v1101
          %1166 = vst [vmem:[%s271 + $0x1c] sm:$0xf] %v1102
          %1167 = vst [vmem:[%s271 + $0x20] sm:$0xf] %v1103
          %1168 = vst [vmem:[%s271 + $0x24] sm:$0xf] %v1104
          %1169 = vst [vmem:[%s271 + $0x28] sm:$0xf] %v1105
          %1170 = vst [vmem:[%s271 + $0x2c] sm:$0xf] %v1106
          %1171 = vst [vmem:[%s271 + $0x30] sm:$0xf] %v1107
          %1172 = vst [vmem:[%s271 + $0x34] sm:$0xf] %v1108
          %1173 = vst [vmem:[%s271 + $0x38] sm:$0xf] %v1109
          %1174 = vst [vmem:[%s271 + $0x3c] sm:$0xf] %v1110
          %1175 = vst [vmem:[%s271 + $0x40] sm:$0xf] %v1111
          %1176 = vst [vmem:[%s271 + $0x44] sm:$0xf] %v1112
          %1177 = vst [vmem:[%s271 + $0x48] sm:$0xf] %v1113
          %1178 = vst [vmem:[%s271 + $0x4c] sm:$0xf] %v1114
          %1179 = vst [vmem:[%s271 + $0x50] sm:$0xf] %v1115
          %1180 = vst [vmem:[%s271 + $0x54] sm:$0xf] %v1116
          %1181 = vst [vmem:[%s271 + $0x58] sm:$0xf] %v1117
          %1182 = vst [vmem:[%s271 + $0x5c] sm:$0xf] %v1118
          %1183 = vst [vmem:[%s271 + $0x60] sm:$0xf] %v1119
          %1184 = vst [vmem:[%s271 + $0x64] sm:$0xf] %v1120
          %1185 = vst [vmem:[%s271 + $0x68] sm:$0xf] %v1121
          %1186 = vst [vmem:[%s271 + $0x6c] sm:$0xf] %v1122
          %1187 = vst [vmem:[%s271 + $0x70] sm:$0xf] %v1123
          %1188 = vst [vmem:[%s271 + $0x74] sm:$0xf] %v1124
          %1189 = vst [vmem:[%s271 + $0x78] sm:$0xf] %v1125
          %1190 = vst [vmem:[%s271 + $0x7c] sm:$0xf] %v1126
        $region48: #{matmul_bn.1} parent=35 // pred_fallthru
          _
        %s1191 = sand.u32 %s155, 1
        %s1192 = scalar_lea.sflag [#allocation4], %s1191
        %s1193 = sand.u32 %s155, 1
        %s1194 = smul.addr %s1193, 128
        %s1195 = scalar_lea.vmem [#allocation3], %s1194
        // Predicated region
        $region49: #{matmul_bn.1} parent=35 // pred_check
          %p1196 = pneg %p165
        $region50: #{matmul_bn.1} parent=35 // pred_check_branch
          %1198 = sbr.rel (%p1196) target = $region52
        $region51: #{matmul_bn.1} parent=35 // pred_region
          %s1199 = smul.u32 32, %s23
          %s1201 = ssub.s32 2048, 2048
          %1202 = vsyncadd %s1192, %s1201
          %s1203 = sadd.s32 %s24, %s1199
          %s1204 = smul.addr %s1203, 64
          %s1205 = scalar_lea.hbm %s4, %s1204
          %s1206 = sshll.u32 %s1195, 4
          %s1207 = int_to_ptr.vmem [resolvable:$true] %s1206
          %1212 = dma.vmem_to_hbm [thread:$0]  %s1207, 2048, %s1205, %s1192, 64, 64, 4
        $region52: #{matmul_bn.1} parent=35 // pred_fallthru
          _
      $region36: #{matmul_bn.1} parent=5 // pred_fallthru
        _
      %p1213 = scmp.le.s32.totalorder 2, %s13
      // Predicated region
      $region53: #{matmul_bn.1} parent=5 // pred_check
        %p1214 = pneg %p1213
      $region54: #{matmul_bn.1} parent=5 // pred_check_branch
        %1216 = sbr.rel (%p1214) target = $region56
      $region55: #{matmul_bn.1} parent=5 // pred_region
        %s1217 = ssub.s32 %s13, 2
        // Predicated region
        $region57: #{matmul_bn.1} parent=55 // pred_check
          %p1218 = pneg %p171
        $region58: #{matmul_bn.1} parent=55 // pred_check_branch
          %1220 = sbr.rel (%p1218) target = $region60
        $region59: #{matmul_bn.1} parent=55 // pred_region
          %s1221 = sand.u32 %s156, 1
          %s1222 = scalar_lea.sflag [#allocation4], %s1221
          %s1223 = sand.u32 %s156, 1
          %s1224 = smul.addr %s1223, 128
          %s1225 = scalar_lea.vmem [#allocation3], %s1224
          %1226 = dma.done %s1222, 2048
        $region60: #{matmul_bn.1} parent=55 // pred_fallthru
          _
      $region56: #{matmul_bn.1} parent=5 // pred_fallthru
        _
    $region6: #{matmul_bn.1} parent=1 // loop_footer
      %s17 = sadd.s32 1, %s13
    $region7: #{matmul_bn.1} parent=1 // loop_footer_branch
      %12 = sbr.rel target = $region3
    $region8: #{matmul_bn.1} parent=1 // loop_exit
      _
    %1227 = vsyncpa [#allocation4], 1
    %s1228 = scalar_lea.sflag [#allocation4], 1
    %1229 = vsyncpa %s1228, 1

</llo_original>
